<compile_context>
chip_gen: v6e
topology: v6e:2x2x1
jax: 0.10.0
libtpu: 0.0.40
codegen_flags: <defaults>
</compile_context>

<pallas_src>
import jax
import jax.numpy as jnp
from jax.experimental import pallas as pl
from jax.experimental.pallas import tpu as pltpu


# --------------------------------------------------------------------------- #
# Kernels
# --------------------------------------------------------------------------- #
def ffn_kernel_resident(x_ref, w1t_ref, b1_ref, w2t_ref, b2_ref, o_ref):
    """Fast path: full W1^T / W2^T live in VMEM (invariant blocks).

    x_ref:   (tm, d_model)
    w1t_ref: (d_model, d_ff)    b1_ref: (1, d_ff)
    w2t_ref: (d_ff, d_model)    b2_ref: (1, d_model)
    o_ref:   (tm, d_model)
    """
    h = jnp.dot(x_ref[...], w1t_ref[...], preferred_element_type=jnp.float32)
    h = jnp.maximum(h + b1_ref[...].astype(jnp.float32), 0.0)
    out = jnp.dot(h.astype(w2t_ref.dtype), w2t_ref[...],
                  preferred_element_type=jnp.float32)
    o_ref[...] = (out + b2_ref[...].astype(jnp.float32)).astype(o_ref.dtype)


def ffn_kernel_tiled(x_ref, w1t_ref, b1_ref, w2t_ref, b2_ref, o_ref, acc_ref):
    """Tiled path: stream d_ff chunks of W1^T / W2^T, accumulate fc2 in f32.

    x_ref:   (tm, d_model)
    w1t_ref: (d_model, tf)      b1_ref: (1, tf)
    w2t_ref: (tf, d_model)      b2_ref: (1, d_model)
    o_ref:   (tm, d_model)      acc_ref: (tm, d_model) f32 scratch
    """
    ff = pl.program_id(1)

    @pl.when(ff == 0)
    def _():
        # Seed the accumulator with b2: saves one epilogue VPU pass over the tile.
        acc_ref[...] = jnp.broadcast_to(
            b2_ref[...].astype(jnp.float32), acc_ref.shape)

    # fc1 chunk: (tm, d_model) @ (d_model, tf) -> (tm, tf), f32 accumulation.
    h = jnp.dot(x_ref[...], w1t_ref[...], preferred_element_type=jnp.float32)
    h = jnp.maximum(h + b1_ref[...].astype(jnp.float32), 0.0)   # ReLU in f32

    # fc2 chunk: (tm, tf) @ (tf, d_model), accumulated over the d_ff axis.
    acc_ref[...] += jnp.dot(h.astype(w2t_ref.dtype), w2t_ref[...],
                            preferred_element_type=jnp.float32)

    @pl.when(ff == pl.num_programs(1) - 1)
    def _():
        o_ref[...] = acc_ref[...].astype(o_ref.dtype)


# --------------------------------------------------------------------------- #
# Tile selection (generation-aware)
# --------------------------------------------------------------------------- #
def _vmem_capacity_bytes():
    """Per-core VMEM capacity; conservative v7x-sized fallback if unavailable."""
    try:
        cap = int(getattr(pltpu.get_tpu_info(), "vmem_capacity_bytes", 0))
        if cap > 0:
            return cap
    except Exception:
        pass
    return 64 * 1024 * 1024


def _est_vmem_bytes(tm, tf, d_model, x_bytes, w_bytes, out_bytes, resident):
    """Conservative live-VMEM estimate for one grid step (double buffering +
    the compiler-materialized f32 h intermediate and its downcast copy)."""
    return (2 * tm * d_model * x_bytes                 # x tile (double buffered)
            + 2 * d_model * tf * w_bytes               # W1^T tile
            + 2 * tf * d_model * w_bytes               # W2^T tile
            + 2 * tm * d_model * out_bytes             # output tile
            + (0 if resident else tm * d_model * 4)    # f32 accumulator scratch
            + tm * tf * 4                              # f32 h intermediate
            + tm * tf * w_bytes                        # h downcast copy
            + 4 * (tf + d_model) * 4)                  # biases (generous)


def _choose_tiles(M, d_model, d_ff, x_bytes, w_bytes, out_bytes):
    """Pick (tm, tf, resident) for the current TPU generation's VMEM."""
    vmem_cap = _vmem_capacity_bytes()
    budget = int(0.70 * vmem_cap)                      # ~44 MiB v7x, ~90 MiB v5e/v6e
    small_vmem = vmem_cap < 100 * 1024 * 1024          # v7x-like: 64 MiB, 2 TCs/chip

    # Row tile: as large as VMEM allows (raises flops/weight-byte in the tiled
    # path).  On v7x keep >= 2 row blocks so both TensorCores get work.
    tm_cap = 512 if small_vmem else 1024
    tm = M if M <= tm_cap else tm_cap
    if small_vmem and M >= 256:
        tm = min(tm, max(128, (M // 2) // 128 * 128))

    def shrink(t):
        if t <= 128:
            return t
        return max(128, ((t // 2) // 8) * 8)

    def est(tm_, tf_, res):
        return _est_vmem_bytes(tm_, tf_, d_model, x_bytes, w_bytes, out_bytes, res)

    # ---- weights-resident fast path ------------------------------------- #
    tm_r = tm
    while True:
        if est(tm_r, d_ff, True) <= budget:
            return tm_r, d_ff, True, vmem_cap
        nxt = shrink(tm_r)
        if nxt == tm_r:
            break
        tm_r = nxt

    # ---- tiled path over d_ff ------------------------------------------- #
    tf_list = [t for t in range(1024, 127, -128) if d_ff % t == 0]
    if not tf_list:
        # No exact multiple-of-128 divisor: the wrapper zero-pads d_ff to a
        # multiple of tf, so any 128-multiple works.
        tf_list = [t for t in (1024, 768, 512, 384, 256, 128) if t < d_ff] or [128]

    tm_t, tf_t = tm, tf_list[0]
    while True:
        fitted = False
        for tf_c in tf_list:
            if est(tm_t, tf_c, False) <= budget:
                tf_t, fitted = tf_c, True
                break
        if fitted:
            break
        nxt = shrink(tm_t)
        if nxt == tm_t:
            tf_t = tf_list[-1]     # last resort: smallest tiles
            break
        tm_t = nxt
    return tm_t, tf_t, False, vmem_cap


# --------------------------------------------------------------------------- #
# Wrapper
# --------------------------------------------------------------------------- #
def position_wise_feed_forward(x, w1, b1, w2, b2, *, tile_override=None):
    """Pallas TPU implementation of fc2(relu(fc1(x))).

    x : (batch, seq, d_model)
    w1: (d_ff, d_model), b1: (d_ff,)      -- nn.Linear(d_model, d_ff) params
    w2: (d_model, d_ff), b2: (d_model,)   -- nn.Linear(d_ff, d_model) params
    tile_override: optional (tm, tf, resident) for testing.
    """
    batch, seq, d_model = x.shape
    d_ff = w1.shape[0]
    assert w1.shape == (d_ff, d_model) and w2.shape == (d_model, d_ff)
    assert b1.shape == (d_ff,) and b2.shape == (d_model,)

    M = batch * seq
    x2d = x.reshape(M, d_model)

    # One-time weight transposes (outside the kernel): both matmuls become plain
    # (m,k)x(k,n) so Mosaic never relayouts a weight tile in the MXU issue slot,
    # and the streamed W2^T tiles are contiguous row slices.  Amortized /
    # constant-folded for static weights under jit.
    w1t = w1.T                      # (d_model, d_ff)
    w2t = w2.T                      # (d_ff, d_model)
    b1_2d = b1.reshape(1, d_ff)
    b2_2d = b2.reshape(1, d_model)

    x_bytes = x.dtype.itemsize
    w_bytes = w1.dtype.itemsize

    if tile_override is not None:
        tm, tf, resident = tile_override
        vmem_cap = _vmem_capacity_bytes()
    else:
        tm, tf, resident, vmem_cap = _choose_tiles(
            M, d_model, d_ff, x_bytes, w_bytes, x_bytes)

    # Zero-pad d_ff to a multiple of tf for the tiled path: padded W1^T columns,
    # b1 entries and W2^T rows are exact zeros, so they contribute nothing.
    d_ff_grid = d_ff
    if (not resident) and d_ff % tf != 0:
        d_ff_grid = pl.cdiv(d_ff, tf) * tf
        pad = d_ff_grid - d_ff
        w1t = jnp.pad(w1t, ((0, 0), (0, pad)))
        w2t = jnp.pad(w2t, ((0, pad), (0, 0)))
        b1_2d = jnp.pad(b1_2d, ((0, 0), (0, pad)))

    est = _est_vmem_bytes(tm, tf, d_model, x_bytes, w_bytes, x_bytes, resident)
    # VMEM limit sized from the estimate (never clamped below it), capped at HW.
    vmem_limit = int(max(32 * 1024 * 1024,
                         min(int(0.98 * vmem_cap), est + 16 * 1024 * 1024)))

    cost = pl.CostEstimate(
        flops=4 * M * d_model * d_ff,
        transcendentals=0,
        bytes_accessed=int(2 * M * d_model * x_bytes
                           + 2 * d_model * d_ff * w_bytes
                           + 4 * (d_ff + d_model)))

    if resident:
        grid = (pl.cdiv(M, tm),)
        in_specs = [
            pl.BlockSpec((tm, d_model), lambda i: (i, 0)),      # x rows
            pl.BlockSpec((d_model, d_ff), lambda i: (0, 0)),    # W1^T (resident)
            pl.BlockSpec((1, d_ff), lambda i: (0, 0)),          # b1   (resident)
            pl.BlockSpec((d_ff, d_model), lambda i: (0, 0)),    # W2^T (resident)
            pl.BlockSpec((1, d_model), lambda i: (0, 0)),       # b2   (resident)
        ]
        out_specs = pl.BlockSpec((tm, d_model), lambda i: (i, 0))
        scratch_shapes = []
        kernel = ffn_kernel_resident
        dim_sem = ("parallel",)
    else:
        grid = (pl.cdiv(M, tm), d_ff_grid // tf)
        in_specs = [
            pl.BlockSpec((tm, d_model), lambda i, ff: (i, 0)),   # x rows (resident over ff)
            pl.BlockSpec((d_model, tf), lambda i, ff: (0, ff)),  # W1^T d_ff chunk
            pl.BlockSpec((1, tf), lambda i, ff: (0, ff)),        # b1 chunk
            pl.BlockSpec((tf, d_model), lambda i, ff: (ff, 0)),  # W2^T chunk (contiguous)
            pl.BlockSpec((1, d_model), lambda i, ff: (0, 0)),    # b2 (invariant)
        ]
        out_specs = pl.BlockSpec((tm, d_model), lambda i, ff: (i, 0))
        scratch_shapes = [pltpu.VMEM((tm, d_model), jnp.float32)]
        kernel = ffn_kernel_tiled
        dim_sem = ("parallel", "arbitrary")

    out2d = pl.pallas_call(
        kernel,
        out_shape=jax.ShapeDtypeStruct((M, d_model), x.dtype),
        grid_spec=pltpu.PrefetchScalarGridSpec(
            num_scalar_prefetch=0,
            grid=grid,
            in_specs=in_specs,
            out_specs=out_specs,
            scratch_shapes=scratch_shapes),
        compiler_params=pltpu.CompilerParams(
            dimension_semantics=dim_sem,
            vmem_limit_bytes=vmem_limit),
        cost_estimate=cost,
    )(x2d, w1t, b1_2d, w2t, b2_2d)

    return out2d.reshape(batch, seq, d_model)


# --------------------------------------------------------------------------- #
# Self-test
# --------------------------------------------------------------------------- #
if __name__ == "__main__":
    # Small shapes consistent with the module: (batch, seq, d_model) token input.
    batch, seq, d_model, d_ff = 2, 8, 32, 64

    key = jax.random.PRNGKey(0)
    kx, kw1, kb1, kw2, kb2 = jax.random.split(key, 5)

    x = jax.random.normal(kx, (batch, seq, d_model), dtype=jnp.float32)
    # PyTorch nn.Linear parameter shapes: weight (out, in), bias (out,)
    w1 = jax.random.normal(kw1, (d_ff, d_model), dtype=jnp.float32) * 0.1
    b1 = jax.random.normal(kb1, (d_ff,), dtype=jnp.float32) * 0.1
    w2 = jax.random.normal(kw2, (d_model, d_ff), dtype=jnp.float32) * 0.1
    b2 = jax.random.normal(kb2, (d_model,), dtype=jnp.float32) * 0.1

    # 1) f32, weights-resident fast path (auto-selected at these shapes).
    out = jax.block_until_ready(position_wise_feed_forward(x, w1, b1, w2, b2))
    ref = jnp.maximum(x @ w1.T + b1, 0.0) @ w2.T + b2
    assert out.shape == (batch, seq, d_model)
    assert jnp.allclose(out, ref, atol=1e-3, rtol=1e-3)

    # 2) bf16 MXU path (production configuration): bf16 inputs/weights, f32 accum.
    xb = x.astype(jnp.bfloat16)
    w1b = w1.astype(jnp.bfloat16)
    w2b = w2.astype(jnp.bfloat16)
    out_bf16 = jax.block_until_ready(position_wise_feed_forward(xb, w1b, b1, w2b, b2))
    ref_bf16 = (jnp.maximum(xb.astype(jnp.float32) @ w1b.astype(jnp.float32).T + b1, 0.0)
                @ w2b.astype(jnp.float32).T + b2)
    assert jnp.allclose(out_bf16.astype(jnp.float32), ref_bf16, atol=5e-2, rtol=5e-2)

    # 3) Tiled path (d_ff streamed + accumulated, incl. zero-padded irregular d_ff),
    #    forced via tile_override at still-small shapes.
    b2_, s2_, dm2, dff2 = 2, 16, 128, 384
    k2 = jax.random.split(jax.random.PRNGKey(0), 5)
    x2 = jax.random.normal(k2[0], (b2_, s2_, dm2), dtype=jnp.float32)
    w1_2 = jax.random.normal(k2[1], (dff2, dm2), dtype=jnp.float32) * 0.05
    b1_2 = jax.random.normal(k2[2], (dff2,), dtype=jnp.float32) * 0.05
    w2_2 = jax.random.normal(k2[3], (dm2, dff2), dtype=jnp.float32) * 0.05
    b2_2 = jax.random.normal(k2[4], (dm2,), dtype=jnp.float32) * 0.05
    out2 = jax.block_until_ready(
        position_wise_feed_forward(x2, w1_2, b1_2, w2_2, b2_2,
                                   tile_override=(16, 256, False)))
    ref2 = jnp.maximum(x2 @ w1_2.T + b1_2, 0.0) @ w2_2.T + b2_2
    assert jnp.allclose(out2, ref2, atol=2e-2, rtol=2e-2)

    print("KERNEL_OK")
</pallas_src>

<mosaic_0001>
module attributes {stable_mosaic.version = 11 : i64} {
  func.func @ffn_kernel_resident(%arg0: i32, %arg1: memref<16x32xf32, #tpu.memory_space<vmem>>, %arg2: memref<32x64xf32, #tpu.memory_space<vmem>>, %arg3: memref<1x64xf32, #tpu.memory_space<vmem>>, %arg4: memref<64x32xf32, #tpu.memory_space<vmem>>, %arg5: memref<1x32xf32, #tpu.memory_space<vmem>>, %arg6: memref<16x32xf32, #tpu.memory_space<vmem>>) attributes {dimension_semantics = [#tpu.dimension_semantics<parallel>], iteration_bounds = array<i64: 1>, scalar_prefetch = 0 : i64, scratch_operands = 0 : i64, tpu.core_type = #tpu.core_type<tc>, window_params = [{transform_indices = @transform_0, window_bounds = array<i64: 16, 32>}, {pipeline_mode = #tpu.pipeline_mode<synchronous>, transform_indices = @transform_1, window_bounds = array<i64: 32, 64>}, {pipeline_mode = #tpu.pipeline_mode<synchronous>, transform_indices = @transform_2, window_bounds = array<i64: 1, 64>}, {pipeline_mode = #tpu.pipeline_mode<synchronous>, transform_indices = @transform_3, window_bounds = array<i64: 64, 32>}, {pipeline_mode = #tpu.pipeline_mode<synchronous>, transform_indices = @transform_4, window_bounds = array<i64: 1, 32>}, {transform_indices = @transform_5, window_bounds = array<i64: 16, 32>}]} {
    %c0 = arith.constant 0 : index
    %c0_0 = arith.constant 0 : index
    %0 = vector.load %arg1[%c0, %c0_0] : memref<16x32xf32, #tpu.memory_space<vmem>>, vector<16x32xf32>
    %c0_1 = arith.constant 0 : index
    %c0_2 = arith.constant 0 : index
    %1 = vector.load %arg2[%c0_1, %c0_2] : memref<32x64xf32, #tpu.memory_space<vmem>>, vector<32x64xf32>
    %cst = arith.constant dense<0.000000e+00> : vector<16x64xf32>
    %2 = tpu.matmul %0, %1, %cst {dimension_numbers = #tpu.dot_dimension_numbers<[1], [0], [0], [1], [0, 0, 1, 1], [], []>} : vector<16x32xf32>, vector<32x64xf32>, vector<16x64xf32> -> vector<16x64xf32>
    %c0_3 = arith.constant 0 : index
    %c0_4 = arith.constant 0 : index
    %3 = vector.load %arg3[%c0_3, %c0_4] : memref<1x64xf32, #tpu.memory_space<vmem>>, vector<1x64xf32>
    %4 = vector.broadcast %3 : vector<1x64xf32> to vector<16x64xf32>
    %5 = arith.addf %2, %4 : vector<16x64xf32>
    %cst_5 = arith.constant 0.000000e+00 : f32
    %6 = vector.broadcast %cst_5 : f32 to vector<16x64xf32>
    %7 = arith.maximumf %5, %6 : vector<16x64xf32>
    %c0_6 = arith.constant 0 : index
    %c0_7 = arith.constant 0 : index
    %8 = vector.load %arg4[%c0_6, %c0_7] : memref<64x32xf32, #tpu.memory_space<vmem>>, vector<64x32xf32>
    %cst_8 = arith.constant dense<0.000000e+00> : vector<16x32xf32>
    %9 = tpu.matmul %7, %8, %cst_8 {dimension_numbers = #tpu.dot_dimension_numbers<[1], [0], [0], [1], [0, 0, 1, 1], [], []>} : vector<16x64xf32>, vector<64x32xf32>, vector<16x32xf32> -> vector<16x32xf32>
    %c0_9 = arith.constant 0 : index
    %c0_10 = arith.constant 0 : index
    %10 = vector.load %arg5[%c0_9, %c0_10] : memref<1x32xf32, #tpu.memory_space<vmem>>, vector<1x32xf32>
    %11 = vector.broadcast %10 : vector<1x32xf32> to vector<16x32xf32>
    %12 = arith.addf %9, %11 : vector<16x32xf32>
    %c0_11 = arith.constant 0 : index
    %c0_12 = arith.constant 0 : index
    %13 = vector.load %arg6[%c0_11, %c0_12] : memref<16x32xf32, #tpu.memory_space<vmem>>, vector<16x32xf32>
    tpu.vector_store %arg6[%c0_11, %c0_12], %12 {strides = array<i32>} : memref<16x32xf32, #tpu.memory_space<vmem>>, vector<16x32xf32>,
    return
  }
  func.func @transform_0(%arg0: i32) -> (i32, i32) {
    %c0_i32 = arith.constant 0 : i32
    %c0_i32_0 = arith.constant 0 : i32
    return %arg0, %c0_i32 : i32, i32
  }
  func.func @transform_1(%arg0: i32) -> (i32, i32) {
    %c0_i32 = arith.constant 0 : i32
    %c0_i32_0 = arith.constant 0 : i32
    %c0_i32_1 = arith.constant 0 : i32
    return %c0_i32, %c0_i32_0 : i32, i32
  }
  func.func @transform_2(%arg0: i32) -> (i32, i32) {
    %c0_i32 = arith.constant 0 : i32
    %c0_i32_0 = arith.constant 0 : i32
    %c0_i32_1 = arith.constant 0 : i32
    return %c0_i32, %c0_i32_0 : i32, i32
  }
  func.func @transform_3(%arg0: i32) -> (i32, i32) {
    %c0_i32 = arith.constant 0 : i32
    %c0_i32_0 = arith.constant 0 : i32
    %c0_i32_1 = arith.constant 0 : i32
    return %c0_i32, %c0_i32_0 : i32, i32
  }
  func.func @transform_4(%arg0: i32) -> (i32, i32) {
    %c0_i32 = arith.constant 0 : i32
    %c0_i32_0 = arith.constant 0 : i32
    %c0_i32_1 = arith.constant 0 : i32
    return %c0_i32, %c0_i32_0 : i32, i32
  }
  func.func @transform_5(%arg0: i32) -> (i32, i32) {
    %c0_i32 = arith.constant 0 : i32
    %c0_i32_0 = arith.constant 0 : i32
    return %arg0, %c0_i32 : i32, i32
  }
}

</mosaic_0001>

<llo_original>
// kernel: tpu_custom_call.1
$region0: #{tpu_custom_call.1}
  #allocation0 [shape = 'u32[]', space=smem, size = 0x4, offset = 0x4, fixed_abs, tag = 'smem constant byte address 0x4 - core index']
  #allocation1 [shape = 'u32[144,128]{1,0:T(1,128)}', space=vmem, size = 0x12000, scoped, tag = 'internal scratch']
  %s0 = inlined_call_operand.vmem [shape: f32[16,32], index: 0, kind: input, shape index: {}]
  %s1 = inlined_call_operand.vmem [shape: f32[32,64], index: 1, kind: input, shape index: {}]
  %s2 = inlined_call_operand.vmem [shape: f32[1,64], index: 2, kind: input, shape index: {}]
  %s3 = inlined_call_operand.vmem [shape: f32[64,32], index: 3, kind: input, shape index: {}]
  %s4 = inlined_call_operand.vmem [shape: f32[1,32], index: 4, kind: input, shape index: {}]
  %s5 = inlined_call_operand.hbm [shape: f32[16,32], index: 5, kind: output, shape index: {}]
  %s6 = sld [smem:[#allocation0]]
  $region30: #{tpu_custom_call.1} parent=0
    _
  %s8 = ssub.s32 1, %s6
  %s9 = scalar_select 0, %s8, %s6
  $region1: #{tpu_custom_call.1} parent=0
    #allocation2 [shape = 'u8[8192]{0}', space=vmem, size = 0x2000, scoped, tag = 'output window, operand 0, single buffered']
    #allocation3 [shape = 's32[1]{0}', space=sflag, size = 0x4, scoped, tag = 'scoped memory for tpu_custom_call.1']
    %10 = vsyncpa [#allocation3], 0
    // Predicated region
    $region2: #{tpu_custom_call.1} parent=1 // pred_check
      _
    $region3: #{tpu_custom_call.1} parent=1 // pred_check_branch
      %12 = sbr.rel (0) target = $region5
    $region4: #{tpu_custom_call.1} parent=1 // pred_region
      _
    $region5: #{tpu_custom_call.1} parent=1 // pred_fallthru
      _
    // Predicated region
    $region6: #{tpu_custom_call.1} parent=1 // pred_check
      _
    $region7: #{tpu_custom_call.1} parent=1 // pred_check_branch
      %14 = sbr.rel (0) target = $region9
    $region8: #{tpu_custom_call.1} parent=1 // pred_region
      _
    $region9: #{tpu_custom_call.1} parent=1 // pred_fallthru
      _
    // Predicated region
    $region10: #{tpu_custom_call.1} parent=1 // pred_check
      _
    $region11: #{tpu_custom_call.1} parent=1 // pred_check_branch
      %16 = sbr.rel (0) target = $region13
    $region12: #{tpu_custom_call.1} parent=1 // pred_region
      _
    $region13: #{tpu_custom_call.1} parent=1 // pred_fallthru
      _
    // Predicated region
    $region14: #{tpu_custom_call.1} parent=1 // pred_check
      _
    $region15: #{tpu_custom_call.1} parent=1 // pred_check_branch
      %18 = sbr.rel (0) target = $region17
    $region16: #{tpu_custom_call.1} parent=1 // pred_region
      _
    $region17: #{tpu_custom_call.1} parent=1 // pred_fallthru
      _
    // Predicated region
    $region18: #{tpu_custom_call.1} parent=1 // pred_check
      _
    $region19: #{tpu_custom_call.1} parent=1 // pred_check_branch
      %20 = sbr.rel (0) target = $region21
    $region20: #{tpu_custom_call.1} parent=1 // pred_region
      _
    $region21: #{tpu_custom_call.1} parent=1 // pred_fallthru
      _
    %v21 = vld [vmem:[%s0] sm:$0xff]
    %v22 = vld [vmem:[%s0 + $0x8] sm:$0xff]
    %v23 = vld [vmem:[%s1] sm:$0xff]
    %v24 = vld [vmem:[%s1 + $0x8] sm:$0xff]
    %v25 = vld [vmem:[%s1 + $0x10] sm:$0xff]
    %v26 = vld [vmem:[%s1 + $0x18] sm:$0xff]
    %v27 = vld [vmem:[%s2] sm:$0x1]
    %v29 = vlaneseq
    %v30 = vshrl.u32 %v29, 7
    %v31 = vsub.s32 0, %v30
    %v32 = vrot.slane %v27, %v31
    %vm34 = vcmask 261120
    %v36 = vsel %vm34, %v21, 0
    %v39 = vsel %vm34, %v22, 0
    %41 = vmatprep.subr.mxu0 0.0
    %42 = vmatpush1.msra.mxu0 0.0
    %43 = vmatprep.subr.mxu0 0.0
    %44 = vmatpush1.msra.mxu0 0.0
    %45 = vmatprep.subr.mxu0 0.0
    %46 = vmatpush1.msra.mxu0 0.0
    %47 = vmatprep.subr.mxu0 0.0
    %48 = vmatpush1.msra.mxu0 0.0
    %49 = vmatprep.subr.mxu0 0.0
    %50 = vmatpush1.msra.mxu0 0.0
    %51 = vmatprep.subr.mxu0 0.0
    %52 = vmatpush1.msra.mxu0 0.0
    %53 = vmatprep.subr.mxu0 0.0
    %54 = vmatpush1.msra.mxu0 0.0
    %55 = vmatprep.subr.mxu0 0.0
    %56 = vmatpush1.msra.mxu0 0.0
    %57 = vmatprep.subr.mxu0 0.0
    %58 = vmatpush1.msra.mxu0 0.0
    %59 = vmatprep.subr.mxu0 0.0
    %60 = vmatpush1.msra.mxu0 0.0
    %61 = vmatprep.subr.mxu0 0.0
    %62 = vmatpush1.msra.mxu0 0.0
    %63 = vmatprep.subr.mxu0 0.0
    %64 = vmatpush1.msra.mxu0 0.0
    %65 = vmatprep.subr.mxu0 0.0
    %66 = vmatpush1.msra.mxu0 %v26
    %67 = vmatprep.subr.mxu0 0.0
    %68 = vmatpush1.msra.mxu0 %v25
    %69 = vmatprep.subr.mxu0 0.0
    %70 = vmatpush1.msra.mxu0 %v24
    %71 = vmatprep.subr.mxu0 0.0
    %72 = vmatpush1.msra.mxu0 %v23
    %73 = vmatprep.subr.mxu0 0.0
    %74 = vmatpush2.msra.mxu0 0.0
    %75 = vmatprep.subr.mxu0 0.0
    %76 = vmatpush2.msra.mxu0 0.0
    %77 = vmatprep.subr.mxu0 0.0
    %78 = vmatpush2.msra.mxu0 0.0
    %79 = vmatprep.subr.mxu0 0.0
    %80 = vmatpush2.msra.mxu0 0.0
    %81 = vmatprep.subr.mxu0 0.0
    %82 = vmatpush2.msra.mxu0 0.0
    %83 = vmatprep.subr.mxu0 0.0
    %84 = vmatpush2.msra.mxu0 0.0
    %85 = vmatprep.subr.mxu0 0.0
    %86 = vmatpush2.msra.mxu0 0.0
    %87 = vmatprep.subr.mxu0 0.0
    %88 = vmatpush2.msra.mxu0 0.0
    %89 = vmatprep.subr.mxu0 0.0
    %90 = vmatpush2.msra.mxu0 0.0
    %91 = vmatprep.subr.mxu0 0.0
    %92 = vmatpush2.msra.mxu0 0.0
    %93 = vmatprep.subr.mxu0 0.0
    %94 = vmatpush2.msra.mxu0 0.0
    %95 = vmatprep.subr.mxu0 0.0
    %96 = vmatpush2.msra.mxu0 0.0
    %97 = vmatprep.subr.mxu0 0.0
    %98 = vmatpush2.msra.mxu0 0.0
    %99 = vmatprep.subr.mxu0 0.0
    %100 = vmatpush2.msra.mxu0 0.0
    %101 = vmatprep.subr.mxu0 0.0
    %102 = vmatpush2.msra.mxu0 0.0
    %103 = vmatprep.subr.mxu0 0.0
    %104 = vmatpush2.msra.mxu0 0.0
    %105 = vmatprep.mubr.f32.mxu0 0.0
    %106 = vmatmul.mubr.f32.gmra.mxu0 %v36
    %v107 = vpop.f32.mrf.mxu0
    %v108 = vadd.f32 %v32, %v107
    %v109 = vpop.f32.mrf.mxu0
    %110 = vmatprep.mubr.f32.mxu0 0.0
    %111 = vmatmul.mubr.f32.gmra.mxu0 %v39
    %v112 = vpop.f32.mrf.mxu0
    %v113 = vadd.f32 %v32, %v112
    %v114 = vpop.f32.mrf.mxu0
    %115 = vdwg.mxu0
    %v116 = vmax.f32 %v108, 0.0
    %v117 = vmax.f32 %v113, 0.0
    %v118 = vld [vmem:[%s3] sm:$0xff]
    %v119 = vld [vmem:[%s3 + $0x8] sm:$0xff]
    %v120 = vld [vmem:[%s3 + $0x10] sm:$0xff]
    %v121 = vld [vmem:[%s3 + $0x18] sm:$0xff]
    %v122 = vld [vmem:[%s3 + $0x20] sm:$0xff]
    %v123 = vld [vmem:[%s3 + $0x28] sm:$0xff]
    %v124 = vld [vmem:[%s3 + $0x30] sm:$0xff]
    %v125 = vld [vmem:[%s3 + $0x38] sm:$0xff]
    %v126 = vld [vmem:[%s4] sm:$0x1]
    %v128 = vlaneseq
    %v129 = vshrl.u32 %v128, 7
    %v130 = vsub.s32 0, %v129
    %v131 = vrot.slane %v126, %v130
    %vm133 = vcmask 523264
    %v135 = vsel %vm133, %v116, 0
    %v138 = vsel %vm133, %v117, 0
    %140 = vmatprep.subr.mxu0 0.0
    %141 = vmatpush1.msra.mxu0 0.0
    %142 = vmatprep.subr.mxu0 0.0
    %143 = vmatpush1.msra.mxu0 0.0
    %144 = vmatprep.subr.mxu0 0.0
    %145 = vmatpush1.msra.mxu0 0.0
    %146 = vmatprep.subr.mxu0 0.0
    %147 = vmatpush1.msra.mxu0 0.0
    %148 = vmatprep.subr.mxu0 0.0
    %149 = vmatpush1.msra.mxu0 0.0
    %150 = vmatprep.subr.mxu0 0.0
    %151 = vmatpush1.msra.mxu0 0.0
    %152 = vmatprep.subr.mxu0 0.0
    %153 = vmatpush1.msra.mxu0 0.0
    %154 = vmatprep.subr.mxu0 0.0
    %155 = vmatpush1.msra.mxu0 0.0
    %156 = vmatprep.subr.mxu0 0.0
    %157 = vmatpush1.msra.mxu0 %v125
    %158 = vmatprep.subr.mxu0 0.0
    %159 = vmatpush1.msra.mxu0 %v124
    %160 = vmatprep.subr.mxu0 0.0
    %161 = vmatpush1.msra.mxu0 %v123
    %162 = vmatprep.subr.mxu0 0.0
    %163 = vmatpush1.msra.mxu0 %v122
    %164 = vmatprep.subr.mxu0 0.0
    %165 = vmatpush1.msra.mxu0 %v121
    %166 = vmatprep.subr.mxu0 0.0
    %167 = vmatpush1.msra.mxu0 %v120
    %168 = vmatprep.subr.mxu0 0.0
    %169 = vmatpush1.msra.mxu0 %v119
    %170 = vmatprep.subr.mxu0 0.0
    %171 = vmatpush1.msra.mxu0 %v118
    %172 = vmatprep.subr.mxu0 0.0
    %173 = vmatpush2.msra.mxu0 0.0
    %174 = vmatprep.subr.mxu0 0.0
    %175 = vmatpush2.msra.mxu0 0.0
    %176 = vmatprep.subr.mxu0 0.0
    %177 = vmatpush2.msra.mxu0 0.0
    %178 = vmatprep.subr.mxu0 0.0
    %179 = vmatpush2.msra.mxu0 0.0
    %180 = vmatprep.subr.mxu0 0.0
    %181 = vmatpush2.msra.mxu0 0.0
    %182 = vmatprep.subr.mxu0 0.0
    %183 = vmatpush2.msra.mxu0 0.0
    %184 = vmatprep.subr.mxu0 0.0
    %185 = vmatpush2.msra.mxu0 0.0
    %186 = vmatprep.subr.mxu0 0.0
    %187 = vmatpush2.msra.mxu0 0.0
    %188 = vmatprep.subr.mxu0 0.0
    %189 = vmatpush2.msra.mxu0 0.0
    %190 = vmatprep.subr.mxu0 0.0
    %191 = vmatpush2.msra.mxu0 0.0
    %192 = vmatprep.subr.mxu0 0.0
    %193 = vmatpush2.msra.mxu0 0.0
    %194 = vmatprep.subr.mxu0 0.0
    %195 = vmatpush2.msra.mxu0 0.0
    %196 = vmatprep.subr.mxu0 0.0
    %197 = vmatpush2.msra.mxu0 0.0
    %198 = vmatprep.subr.mxu0 0.0
    %199 = vmatpush2.msra.mxu0 0.0
    %200 = vmatprep.subr.mxu0 0.0
    %201 = vmatpush2.msra.mxu0 0.0
    %202 = vmatprep.subr.mxu0 0.0
    %203 = vmatpush2.msra.mxu0 0.0
    %204 = vmatprep.mubr.f32.mxu0 0.0
    %205 = vmatmul.mubr.f32.gmra.mxu0 %v135
    %v206 = vpop.f32.mrf.mxu0
    %v207 = vadd.f32 %v131, %v206
    %v208 = vpop.f32.mrf.mxu0
    %209 = vmatprep.mubr.f32.mxu0 0.0
    %210 = vmatmul.mubr.f32.gmra.mxu0 %v138
    %v211 = vpop.f32.mrf.mxu0
    %v212 = vadd.f32 %v131, %v211
    %v213 = vpop.f32.mrf.mxu0
    %214 = vdwg.mxu0
    %215 = vst.msk [vmem:[#allocation2] sm:$0xff] %vm34, %v207
    %216 = vst.msk [vmem:[#allocation2 + $0x8] sm:$0xff] %vm34, %v212
    // Predicated region
    $region22: #{tpu_custom_call.1} parent=1 // pred_check
      _
    $region23: #{tpu_custom_call.1} parent=1 // pred_check_branch
      %218 = sbr.rel (0) target = $region25
    $region24: #{tpu_custom_call.1} parent=1 // pred_region
      %s220 = ssub.s32 256, 256
      %221 = vsyncadd [#allocation3], %s220
      %s222 = sshll.u32 [#allocation2], 4
      %s223 = int_to_ptr.vmem [resolvable:$true] %s222
      %228 = dma.vmem_to_hbm [thread:$0]  %s223, 256, %s5, [#allocation3], 128, 128, 8
    $region25: #{tpu_custom_call.1} parent=1 // pred_fallthru
      _
    // Predicated region
    $region26: #{tpu_custom_call.1} parent=1 // pred_check
      _
    $region27: #{tpu_custom_call.1} parent=1 // pred_check_branch
      %230 = sbr.rel (0) target = $region29
    $region28: #{tpu_custom_call.1} parent=1 // pred_region
      %231 = dma.done [#allocation3], 256
    $region29: #{tpu_custom_call.1} parent=1 // pred_fallthru
      _
    %232 = vsyncpa [#allocation3], 1

</llo_original>
